<compile_context>
chip_gen: v7x
topology: tpu7x:2x2x1
jax: 0.10.0
libtpu: 0.0.40
codegen_flags: <defaults>
</compile_context>

<pallas_src>
import math

import jax
import jax.numpy as jnp
import numpy as np
from jax.experimental import pallas as pl
from jax.experimental.pallas import tpu as pltpu


def _round_up(n, m):
    return ((n + m - 1) // m) * m


def _num_tensorcores():
    # v7x has 2 TensorCores per chip; v5e/v6e have 1.  Safe fallback = 1.
    try:
        kind = jax.devices()[0].device_kind.lower()
        if "v7" in kind:
            return 2
    except Exception:
        pass
    return 1


# ----------------------------------------------------------------------------
# Kernels
# ----------------------------------------------------------------------------
def _single_dot_kernel(x_ref, w_ref, b_ref, o_ref):
    # (B, out_f_p) <- (B, in_f) @ (in_f, out_f_p); out_f_p is a 128-multiple,
    # so the store is lane-dense (unmasked vst).
    o_ref[...] = (
        jnp.dot(x_ref[...], w_ref[...], preferred_element_type=jnp.float32)
        + b_ref[...]
    )


def _two_dot_kernel(x_ref, bases_t_ref, lamb_t_ref, b_ref, o_ref):
    # Kept only for large M (>=128) where splitting the contraction pays off.
    tmp = jnp.dot(x_ref[...], bases_t_ref[...], preferred_element_type=jnp.float32)
    o_ref[...] = (
        jnp.dot(tmp, lamb_t_ref[...], preferred_element_type=jnp.float32)
        + b_ref[...]
    )


# ----------------------------------------------------------------------------
# Wrapper
# ----------------------------------------------------------------------------
def fourier_reparam_linear(x, lamb_t, bases_t, bias, *, fold_weight=None,
                           block_b=None):
    """Forward pass of Fourier_reparam_linear.

    x:       (B, in_f) float32
    lamb_t:  (M, out_f)  == lamb.T   (pre-transposed trainable parameter)
    bases_t: (in_f, M)   == bases.T  (pre-transposed fixed basis)
    bias:    (out_f, 1)
    fold_weight: if True (default when M < 128), fold weight_t = bases_t@lamb_t
                 in the wrapper and run a single in-kernel dot.
    block_b: force a batch-grid with this block size (mainly for testing the
             tiled path); default is chosen per chip generation.
    """
    B, in_f = x.shape
    M, out_f = lamb_t.shape
    assert bases_t.shape == (in_f, M)
    x = x.astype(jnp.float32)

    if fold_weight is None:
        fold_weight = M < 128  # tiny contraction -> one MXU dot wins

    # --- pad out_features to a 128 multiple for lane-dense output stores ---
    out_f_p = _round_up(out_f, 128)
    pad_cols = out_f_p - out_f

    bias_row = bias.reshape(1, out_f).astype(jnp.float32)  # bias.T
    if pad_cols:
        bias_row = jnp.pad(bias_row, ((0, 0), (0, pad_cols)))

    if fold_weight:
        # weight_t = (lamb @ bases).T computed once per call (handles updated
        # lamb during training); ~in_f*M*out_f MACs, negligible in XLA.
        weight_t = (bases_t.astype(jnp.float32) @ lamb_t.astype(jnp.float32))
        if pad_cols:
            weight_t = jnp.pad(weight_t, ((0, 0), (0, pad_cols)))
        operands = (weight_t, bias_row)
        kernel = _single_dot_kernel
        operand_specs = [
            pl.BlockSpec((in_f, out_f_p), lambda i: (0, 0)),
            pl.BlockSpec((1, out_f_p), lambda i: (0, 0)),
        ]
        flops = 2 * B * in_f * out_f_p
        bytes_acc = 4 * (B * in_f + in_f * out_f_p + out_f_p + B * out_f_p)
    else:
        lamb_t_p = lamb_t.astype(jnp.float32)
        if pad_cols:
            lamb_t_p = jnp.pad(lamb_t_p, ((0, 0), (0, pad_cols)))
        operands = (bases_t.astype(jnp.float32), lamb_t_p, bias_row)
        kernel = _two_dot_kernel
        operand_specs = [
            pl.BlockSpec((in_f, M), lambda i: (0, 0)),
            pl.BlockSpec((M, out_f_p), lambda i: (0, 0)),
            pl.BlockSpec((1, out_f_p), lambda i: (0, 0)),
        ]
        flops = 2 * B * M * (in_f + out_f_p)
        bytes_acc = 4 * (B * in_f + in_f * M + M * out_f_p + out_f_p
                         + B * out_f_p)

    cost = pl.CostEstimate(flops=flops, transcendentals=0,
                           bytes_accessed=bytes_acc)

    # --- pick batch tiling ---------------------------------------------------
    n_cores = _num_tensorcores()
    bytes_per_row = 4 * (in_f + out_f_p)
    whole_bytes = B * bytes_per_row + 4 * (in_f * out_f_p + M * out_f_p
                                           + in_f * M + out_f_p)
    VMEM_BUDGET = 8 << 20  # conservative; well under scoped default everywhere

    use_grid = False
    if block_b is not None:
        block_b = _round_up(int(block_b), 8)
        use_grid = True
    elif n_cores >= 2 and B >= 1024:
        # v7x: exactly one large block per TensorCore.
        block_b = _round_up(pl.cdiv(B, n_cores), 8)
        use_grid = True
    elif whole_bytes > VMEM_BUDGET:
        # Single TC: big tiles amortize the ~0.35 us per-step overhead.
        block_b = 2048
        use_grid = True

    if not use_grid:
        # Whole arrays as single VMEM blocks — no grid bookkeeping.
        out = pl.pallas_call(
            kernel,
            out_shape=jax.ShapeDtypeStruct((B, out_f_p), jnp.float32),
            in_specs=[pl.BlockSpec(memory_space=pltpu.MemorySpace.VMEM)]
            * (1 + len(operands)),
            out_specs=pl.BlockSpec(memory_space=pltpu.MemorySpace.VMEM),
            cost_estimate=cost,
        )(x, *operands)
        return out[:, :out_f] if pad_cols else out

    # Tiled path: cdiv grid over (host-padded) batch; params broadcast.
    n_blocks = pl.cdiv(B, block_b)
    B_pad = n_blocks * block_b
    x_p = jnp.pad(x, ((0, B_pad - B), (0, 0))) if B_pad != B else x

    out = pl.pallas_call(
        kernel,
        out_shape=jax.ShapeDtypeStruct((B_pad, out_f_p), jnp.float32),
        grid=(n_blocks,),
        in_specs=[pl.BlockSpec((block_b, in_f), lambda i: (i, 0))]
        + operand_specs,
        out_specs=pl.BlockSpec((block_b, out_f_p), lambda i: (i, 0)),
        compiler_params=pltpu.CompilerParams(
            dimension_semantics=("parallel",)),
        cost_estimate=cost,
    )(x_p, *operands)
    return out[:B, :out_f]


# ----------------------------------------------------------------------------
# Deterministic parameter construction mirroring the PyTorch __init__.
# Returns params already transposed for the kernel (bases_t, lamb_t).
# ----------------------------------------------------------------------------
def make_params(in_features, out_features, high_freq_num, low_freq_num,
                phi_num, alpha, key):
    # --- bases (fixed, non-trainable), shape (M, in_features) ---
    phi_set = np.array([2 * math.pi * i / phi_num for i in range(phi_num)])
    high_freq = np.array([i + 1 for i in range(high_freq_num)], dtype=np.float64)
    low_freq = np.array(
        [(i + 1) / low_freq_num for i in range(low_freq_num)], dtype=np.float64
    )
    if len(low_freq) != 0:
        T_max = 2 * math.pi / low_freq[0]
    else:
        T_max = 2 * math.pi / high_freq.min()
    points = np.linspace(-T_max / 2, T_max / 2, in_features)

    rows = []
    for freq in low_freq:
        for phi in phi_set:
            rows.append(np.cos(freq * points + phi))
    for freq in high_freq:
        for phi in phi_set:
            rows.append(np.cos(freq * points + phi))
    bases = alpha * np.stack(rows, axis=0).astype(np.float32)  # (M, in_features)

    # --- lamb (trainable): per-column uniform(-b_i, b_i),
    #     b_i = sqrt(6/M)/||bases_i||_2 ---
    M = (high_freq_num + low_freq_num) * phi_num
    norms = np.linalg.norm(bases, ord=2, axis=1)  # (M,)
    bound = (np.sqrt(6.0 / M) / norms).astype(np.float32)  # (M,)
    u = jax.random.uniform(key, (out_features, M), minval=-1.0, maxval=1.0)
    lamb = (u * jnp.asarray(bound)[None, :]).astype(jnp.float32)  # (out_f, M)

    # --- bias (zeros), shape (out_features, 1) ---
    bias = jnp.zeros((out_features, 1), dtype=jnp.float32)

    # Pre-transpose once on the host so the kernel's contractions are natural.
    bases_t = jnp.asarray(bases).T  # (in_features, M)
    lamb_t = lamb.T                 # (M, out_features)
    return lamb_t, bases_t, bias


# ----------------------------------------------------------------------------
# Main
# ----------------------------------------------------------------------------
if __name__ == "__main__":
    in_features = 64
    out_features = 32
    high_freq_num = 2
    low_freq_num = 2
    phi_num = 4
    alpha = 0.1
    batch = 8

    key = jax.random.PRNGKey(0)
    k_lamb, k_x, k_x2 = jax.random.split(key, 3)

    lamb_t, bases_t, bias = make_params(
        in_features, out_features, high_freq_num, low_freq_num, phi_num, alpha,
        k_lamb,
    )

    # Plain-JAX reference with the ORIGINAL (PyTorch) association & layout.
    lamb = lamb_t.T     # (out_f, M)
    bases = bases_t.T   # (M, in_f)
    weight = lamb @ bases                         # (out_f, in_f)

    # --- small-shape path (no grid, folded single-dot kernel) ---
    x = jax.random.normal(k_x, (batch, in_features), dtype=jnp.float32)
    out = fourier_reparam_linear(x, lamb_t, bases_t, bias)
    out = jax.block_until_ready(out)
    ref = x @ weight.T + bias.T
    assert out.shape == (batch, out_features)
    np.testing.assert_allclose(np.asarray(out), np.asarray(ref),
                               rtol=1e-4, atol=1e-5)

    # --- tiled path with ragged batch (cdiv grid + host pad), forced block_b ---
    big_batch = 300
    x_big = jax.random.normal(k_x2, (big_batch, in_features), dtype=jnp.float32)
    out_big = fourier_reparam_linear(x_big, lamb_t, bases_t, bias, block_b=128)
    out_big = jax.block_until_ready(out_big)
    ref_big = x_big @ weight.T + bias.T
    assert out_big.shape == (big_batch, out_features)
    np.testing.assert_allclose(np.asarray(out_big), np.asarray(ref_big),
                               rtol=1e-4, atol=1e-5)

    # --- two-dot (reassociated) kernel kept behind a flag; sanity-check it ---
    out_2dot = fourier_reparam_linear(x, lamb_t, bases_t, bias,
                                      fold_weight=False)
    out_2dot = jax.block_until_ready(out_2dot)
    np.testing.assert_allclose(np.asarray(out_2dot), np.asarray(ref),
                               rtol=1e-4, atol=1e-5)

    print("KERNEL_OK")
</pallas_src>

<mosaic_0001>
module attributes {stable_mosaic.version = 11 : i64} {
  func.func @_single_dot_kernel(%arg0: memref<8x64xf32, #tpu.memory_space<vmem>>, %arg1: memref<64x128xf32, #tpu.memory_space<vmem>>, %arg2: memref<1x128xf32, #tpu.memory_space<vmem>>, %arg3: memref<8x128xf32, #tpu.memory_space<vmem>>) attributes {dimension_semantics = [], scalar_prefetch = 0 : i64, scratch_operands = 0 : i64, tpu.core_type = #tpu.core_type<tc>} {
    %c0 = arith.constant 0 : index
    %c0_0 = arith.constant 0 : index
    %0 = vector.load %arg0[%c0, %c0_0] : memref<8x64xf32, #tpu.memory_space<vmem>>, vector<8x64xf32>
    %c0_1 = arith.constant 0 : index
    %c0_2 = arith.constant 0 : index
    %1 = vector.load %arg1[%c0_1, %c0_2] : memref<64x128xf32, #tpu.memory_space<vmem>>, vector<64x128xf32>
    %cst = arith.constant dense<0.000000e+00> : vector<8x128xf32>
    %2 = tpu.matmul %0, %1, %cst {dimension_numbers = #tpu.dot_dimension_numbers<[1], [0], [0], [1], [0, 0, 1, 1], [], []>} : vector<8x64xf32>, vector<64x128xf32>, vector<8x128xf32> -> vector<8x128xf32>
    %c0_3 = arith.constant 0 : index
    %c0_4 = arith.constant 0 : index
    %3 = vector.load %arg2[%c0_3, %c0_4] : memref<1x128xf32, #tpu.memory_space<vmem>>, vector<1x128xf32>
    %4 = vector.broadcast %3 : vector<1x128xf32> to vector<8x128xf32>
    %5 = arith.addf %2, %4 : vector<8x128xf32>
    %c0_5 = arith.constant 0 : index
    %c0_6 = arith.constant 0 : index
    %6 = vector.load %arg3[%c0_5, %c0_6] : memref<8x128xf32, #tpu.memory_space<vmem>>, vector<8x128xf32>
    tpu.vector_store %arg3[%c0_5, %c0_6], %5 {strides = array<i32>} : memref<8x128xf32, #tpu.memory_space<vmem>>, vector<8x128xf32>,
    return
  }
}

</mosaic_0001>

<llo_original>
// kernel: tpu_custom_call.1
$region0: #{tpu_custom_call.1}
  #allocation0 [shape = 'u32[]', space=smem, size = 0x4, offset = 0x4, fixed_abs, tag = 'smem constant byte address 0x4 - core index']
  #allocation1 [shape = 'u32[144,128]{1,0:T(1,128)}', space=vmem, size = 0x12000, scoped, tag = 'internal scratch']
  %s0 = inlined_call_operand.hbm [shape: f32[8,64], index: 0, kind: input, shape index: {}]
  %s1 = inlined_call_operand.hbm [shape: f32[64,128], index: 1, kind: input, shape index: {}]
  %s2 = inlined_call_operand.vmem [shape: f32[1,128], index: 2, kind: input, shape index: {}]
  %s3 = inlined_call_operand.hbm [shape: f32[8,128], index: 3, kind: output, shape index: {}]
  %s4 = sld [smem:[#allocation0]]
  $region30: #{tpu_custom_call.1} parent=0
    _
  %s6 = ssub.s32 1, %s4
  %s7 = scalar_select 0, %s6, %s4
  $region1: #{tpu_custom_call.1} parent=0
    #allocation2 [shape = 'u8[4096]{0}', space=vmem, size = 0x1000, scoped, tag = 'input window, operand 0, single buffered']
    #allocation3 [shape = 's32[1]{0}', space=sflag, size = 0x4, scoped, tag = 'scoped memory for tpu_custom_call.1']
    #allocation4 [shape = 's32[1]{0}', space=sflag, size = 0x4, scoped, tag = 'scoped memory for tpu_custom_call.1']
    #allocation5 [shape = 'u8[32768]{0}', space=vmem, size = 0x8000, scoped, tag = 'input window, operand 1, single buffered']
    #allocation6 [shape = 's32[1]{0}', space=sflag, size = 0x4, scoped, tag = 'scoped memory for tpu_custom_call.1']
    #allocation7 [shape = 'u8[4096]{0}', space=vmem, size = 0x1000, scoped, tag = 'output window, operand 0, single buffered']
    %8 = vsyncpa [#allocation3], 0
    %9 = vsyncpa [#allocation6], 0
    %10 = vsyncpa [#allocation4], 0
    // Predicated region
    $region2: #{tpu_custom_call.1} parent=1 // pred_check
      _
    $region3: #{tpu_custom_call.1} parent=1 // pred_check_branch
      %12 = sbr.rel (0) target = $region5
    $region4: #{tpu_custom_call.1} parent=1 // pred_region
      %s14 = ssub.s32 128, 128
      %15 = vsyncadd [#allocation3], %s14
      %s17 = sshll.u32 [#allocation2], 4
      %s18 = int_to_ptr.vmem [resolvable:$true] %s17
      %20 = dma.hbm_to_vmem [thread:$0]  %s0, 128, %s18, [#allocation3]
    $region5: #{tpu_custom_call.1} parent=1 // pred_fallthru
      _
    // Predicated region
    $region6: #{tpu_custom_call.1} parent=1 // pred_check
      _
    $region7: #{tpu_custom_call.1} parent=1 // pred_check_branch
      %22 = sbr.rel (0) target = $region9
    $region8: #{tpu_custom_call.1} parent=1 // pred_region
      %s24 = ssub.s32 1024, 1024
      %25 = vsyncadd [#allocation6], %s24
      %s26 = sshll.u32 [#allocation5], 4
      %s27 = int_to_ptr.vmem [resolvable:$true] %s26
      %32 = dma.hbm_to_vmem [thread:$0]  %s1, 1024, %s27, [#allocation6], 128, 128, 8
    $region9: #{tpu_custom_call.1} parent=1 // pred_fallthru
      _
    // Predicated region
    $region10: #{tpu_custom_call.1} parent=1 // pred_check
      _
    $region11: #{tpu_custom_call.1} parent=1 // pred_check_branch
      %34 = sbr.rel (0) target = $region13
    $region12: #{tpu_custom_call.1} parent=1 // pred_region
      _
    $region13: #{tpu_custom_call.1} parent=1 // pred_fallthru
      _
    // Predicated region
    $region14: #{tpu_custom_call.1} parent=1 // pred_check
      _
    $region15: #{tpu_custom_call.1} parent=1 // pred_check_branch
      %36 = sbr.rel (0) target = $region17
    $region16: #{tpu_custom_call.1} parent=1 // pred_region
      %37 = dma.done [#allocation3], 128
    $region17: #{tpu_custom_call.1} parent=1 // pred_fallthru
      _
    // Predicated region
    $region18: #{tpu_custom_call.1} parent=1 // pred_check
      _
    $region19: #{tpu_custom_call.1} parent=1 // pred_check_branch
      %39 = sbr.rel (0) target = $region21
    $region20: #{tpu_custom_call.1} parent=1 // pred_region
      %40 = dma.done [#allocation6], 1024
    $region21: #{tpu_custom_call.1} parent=1 // pred_fallthru
      _
    %v41 = vld [vmem:[#allocation2] sm:$0xff]
    %v42 = vld [vmem:[#allocation5] sm:$0xff]
    %v43 = vld [vmem:[#allocation5 + $0x8] sm:$0xff]
    %v44 = vld [vmem:[#allocation5 + $0x10] sm:$0xff]
    %v45 = vld [vmem:[#allocation5 + $0x18] sm:$0xff]
    %v46 = vld [vmem:[#allocation5 + $0x20] sm:$0xff]
    %v47 = vld [vmem:[#allocation5 + $0x28] sm:$0xff]
    %v48 = vld [vmem:[#allocation5 + $0x30] sm:$0xff]
    %v49 = vld [vmem:[#allocation5 + $0x38] sm:$0xff]
    %v50 = vld [vmem:[%s2] sm:$0x1]
    %v52 = vlaneseq
    %v53 = vshrl.u32 %v52, 7
    %v54 = vsub.s32 0, %v53
    %v55 = vrot.slane %v50, %v54
    %vm57 = vcmask 523264
    %v59 = vsel %vm57, %v41, 0
    %61 = vmatprep.subr.mxu0 0.0
    %62 = vmatpush1.msra.mxu0 %v42
    %63 = vmatprep.subr.mxu0 0.0
    %64 = vmatpush1.msra.mxu0 %v43
    %65 = vmatprep.subr.mxu0 0.0
    %66 = vmatpush1.msra.mxu0 %v44
    %67 = vmatprep.subr.mxu0 0.0
    %68 = vmatpush1.msra.mxu0 %v45
    %69 = vmatprep.subr.mxu0 0.0
    %70 = vmatpush1.msra.mxu0 %v46
    %71 = vmatprep.subr.mxu0 0.0
    %72 = vmatpush1.msra.mxu0 %v47
    %73 = vmatprep.subr.mxu0 0.0
    %74 = vmatpush1.msra.mxu0 %v48
    %75 = vmatprep.subr.mxu0 0.0
    %76 = vmatpush1.msra.mxu0 %v49
    %77 = vmatprep.subr.mxu0 0.0
    %78 = vmatpush1.msra.mxu0 0.0
    %79 = vmatprep.subr.mxu0 0.0
    %80 = vmatpush1.msra.mxu0 0.0
    %81 = vmatprep.subr.mxu0 0.0
    %82 = vmatpush1.msra.mxu0 0.0
    %83 = vmatprep.subr.mxu0 0.0
    %84 = vmatpush1.msra.mxu0 0.0
    %85 = vmatprep.subr.mxu0 0.0
    %86 = vmatpush1.msra.mxu0 0.0
    %87 = vmatprep.subr.mxu0 0.0
    %88 = vmatpush1.msra.mxu0 0.0
    %89 = vmatprep.subr.mxu0 0.0
    %90 = vmatpush1.msra.mxu0 0.0
    %91 = vmatprep.subr.mxu0 0.0
    %92 = vmatpush1.msra.mxu0 0.0
    %93 = vmatprep.subr.mxu0 0.0
    %94 = vmatpush1.msra.mxu0 0.0
    %95 = vmatprep.subr.mxu0 0.0
    %96 = vmatpush1.msra.mxu0 0.0
    %97 = vmatprep.subr.mxu0 0.0
    %98 = vmatpush1.msra.mxu0 0.0
    %99 = vmatprep.subr.mxu0 0.0
    %100 = vmatpush1.msra.mxu0 0.0
    %101 = vmatprep.subr.mxu0 0.0
    %102 = vmatpush1.msra.mxu0 0.0
    %103 = vmatprep.subr.mxu0 0.0
    %104 = vmatpush1.msra.mxu0 0.0
    %105 = vmatprep.subr.mxu0 0.0
    %106 = vmatpush1.msra.mxu0 0.0
    %107 = vmatprep.subr.mxu0 0.0
    %108 = vmatpush1.msra.mxu0 0.0
    %109 = vmatprep.subr.mxu0 0.0
    %110 = vmatpush1.msra.mxu0 0.0
    %111 = vmatprep.subr.mxu0 0.0
    %112 = vmatpush1.msra.mxu0 0.0
    %113 = vmatprep.subr.mxu0 0.0
    %114 = vmatpush1.msra.mxu0 0.0
    %115 = vmatprep.subr.mxu0 0.0
    %116 = vmatpush1.msra.mxu0 0.0
    %117 = vmatprep.subr.mxu0 0.0
    %118 = vmatpush1.msra.mxu0 0.0
    %119 = vmatprep.subr.mxu0 0.0
    %120 = vmatpush1.msra.mxu0 0.0
    %121 = vmatprep.subr.mxu0 0.0
    %122 = vmatpush1.msra.mxu0 0.0
    %123 = vmatprep.subr.mxu0 0.0
    %124 = vmatpush1.msra.mxu0 0.0
    %125 = vmatprep.mubr.f32.mxu0 0.0
    %126 = vmatmul.mubr.f32.gmra.mrb[0].mxu0 %v59
    %v127 = vpop.f32.mrb[0].mxu0
    %v128 = vadd.f32 %v55, %v127
    %v129 = vpop.f32.mrb[0].mxu0
    %130 = vdwg.mxu0
    %131 = vst [vmem:[#allocation7] sm:$0xff] %v128
    // Predicated region
    $region22: #{tpu_custom_call.1} parent=1 // pred_check
      _
    $region23: #{tpu_custom_call.1} parent=1 // pred_check_branch
      %133 = sbr.rel (0) target = $region25
    $region24: #{tpu_custom_call.1} parent=1 // pred_region
      %s135 = ssub.s32 128, 128
      %136 = vsyncadd [#allocation4], %s135
      %s138 = sshll.u32 [#allocation7], 4
      %s139 = int_to_ptr.vmem [resolvable:$true] %s138
      %141 = dma.vmem_to_hbm [thread:$0]  %s139, 128, %s3, [#allocation4]
    $region25: #{tpu_custom_call.1} parent=1 // pred_fallthru
      _
    // Predicated region
    $region26: #{tpu_custom_call.1} parent=1 // pred_check
      _
    $region27: #{tpu_custom_call.1} parent=1 // pred_check_branch
      %143 = sbr.rel (0) target = $region29
    $region28: #{tpu_custom_call.1} parent=1 // pred_region
      %144 = dma.done [#allocation4], 128
    $region29: #{tpu_custom_call.1} parent=1 // pred_fallthru
      _
    %145 = vsyncpa [#allocation3], 1
    %146 = vsyncpa [#allocation6], 1
    %147 = vsyncpa [#allocation4], 1

</llo_original>
